<compile_context>
chip_gen: v7x
topology: tpu7x:2x2x1
jax: 0.10.0
libtpu: 0.0.40
codegen_flags: <defaults>
</compile_context>

<pallas_src>
import functools

import jax
import jax.numpy as jnp
from jax.experimental import pallas as pl
from jax.experimental.pallas import tpu as pltpu


def _elu(v):
    # PyTorch nn.ELU(alpha=1.0); exp(min(v,0)) avoids overflow on the dead branch.
    return jnp.where(v > 0, v, jnp.exp(jnp.minimum(v, 0.0)) - 1.0)


def _roll_probe_kernel(x_ref, o_ref):
    o_ref[...] = pltpu.roll(x_ref[...], 1, axis=1)


@functools.lru_cache(maxsize=None)
def _roll_matches_jnp():
    """One-time probe: does pltpu.roll follow jnp.roll semantics?"""
    x = jnp.tile(jnp.arange(128, dtype=jnp.float32)[None, :], (8, 1))
    out = pl.pallas_call(
        _roll_probe_kernel,
        out_shape=jax.ShapeDtypeStruct((8, 128), jnp.float32))(x)
    # jnp.roll(x, 1)[0] == x[-1] == 127.
    return bool(out[0, 0] == 127.0)


def _shift(x, off, length, roll_jnp):
    """Return y with y[:, p] = x[:, (p + off) % length]; `off` is a Python int."""
    if off == 0:
        return x
    shift = (-off if roll_jnp else off) % length
    return pltpu.roll(x, shift, axis=1)


def _denoise_kernel(width, L, D, offs1, offs2, roll_jnp,
                    x_ref, w0_ref, b0_ref, w1_ref, b1_ref, w2_ref, b2_ref,
                    w3_ref, b3_ref, mfull_ref, msprd_ref,
                    wh1_ref, wh2_ref, whq_ref, sel_ref,
                    bh1_ref, bh2_ref, bhq_ref, out_ref):
    mfull = mfull_ref[...]          # (1, L): 1 on in-image interior pixels
    msprd = msprd_ref[...]          # (1, L): 1 on "spread" half-res pixel slots

    def conv3x3(act, w_ref, b_ref, offs):
        # One [Cout, 9*Cin] x [9*Cin, L] matmul; the 9 taps are lane rolls of the
        # flat padded activation (no strided im2col slicing / copies).
        slab = jnp.concatenate(
            [_shift(act, o, L, roll_jnp) for o in offs], axis=0
        ).astype(jnp.bfloat16)
        y = jnp.dot(w_ref[...], slab, preferred_element_type=jnp.float32)
        return y + b_ref[...]

    x = x_ref[...]                                          # (CIN, L) f32
    out0 = conv3x3(x, w0_ref, b0_ref, offs1) * mfull        # conv
    out1 = conv3x3(out0, w1_ref, b1_ref, offs1)             # conv1
    out2 = (_elu(out1) + out1) * mfull                      # ELU + residual

    # 2x2 block sums for the avg-pool (the 0.25 is folded into w2 in the wrapper).
    t = out2 + _shift(out2, 1, L, roll_jnp)
    s = t + _shift(t, width + 2, L, roll_jnp)

    # conv2 / conv3 run on the half-res grid "in place": their taps are stride-2
    # lane rolls and their outputs live on the odd (spread) pixel slots.
    out4 = conv3x3(s, w2_ref, b2_ref, offs2)                # conv2 (pool fused)
    out5 = (_elu(out4) + out4) * msprd                      # ELU + residual
    out7 = conv3x3(out5, w3_ref, b3_ref, offs2)             # conv3
    out8 = _elu(out7) * msprd                               # ELU

    # Linear heads: weights were pre-scattered onto the spread slots, so the
    # three reductions become one elementwise pass + one MXU matmul.
    t1 = out8 * wh1_ref[...]
    t2 = out8 * wh2_ref[...]
    tq = out8 * out8 * whq_ref[...]
    stacked = jnp.concatenate([t1, t2, tq], axis=0)         # (3D, L) f32
    red = jnp.dot(stacked, sel_ref[...],
                  precision=jax.lax.Precision.HIGHEST,
                  preferred_element_type=jnp.float32)       # (3D, 128)
    l1 = jnp.sum(red[0:D], axis=0, keepdims=True) + bh1_ref[...]
    l2 = jnp.sum(red[D:2 * D], axis=0, keepdims=True) + bh2_ref[...]
    lq = jnp.sum(red[2 * D:], axis=0, keepdims=True) + bhq_ref[...]
    out_ref[...] = l1 * l2 + lq                             # (1, 128); lanes >= N unused


def denoise_net_forward(x_nchw, params, block_b=8):
    B, CIN, H, W = x_nchw.shape
    D = params["w1"].shape[0]
    assert H % 2 == 0 and W % 2 == 0, "2x2 avg pool needs even spatial size"
    Hh, Wh = H // 2, W // 2
    Npi = (H + 2) * (W + 2)                       # flat padded pixels per image
    Npi_pad = ((Npi + 127) // 128) * 128          # lane-tile aligned per-image stride

    # Images per grid step; keep >= 2 grid steps when possible (megacore/pipelining).
    N = max(1, min(block_b, B))
    if B >= 2 and -(-B // N) < 2:
        N = max(1, B // 2)
    B_pad = -(-B // N) * N
    L = N * Npi_pad
    num_blocks = B_pad // N

    roll_jnp = _roll_matches_jnp()

    # ---- input: channel-major, flat padded layout [CIN, B_pad * Npi_pad] ------
    x = x_nchw.astype(jnp.float32)
    if B_pad != B:
        x = jnp.pad(x, ((0, B_pad - B), (0, 0), (0, 0), (0, 0)))
    xp = jnp.pad(x, ((0, 0), (0, 0), (1, 1), (1, 1))).reshape(B_pad, CIN, Npi)
    xp = jnp.pad(xp, ((0, 0), (0, 0), (0, Npi_pad - Npi)))
    x_cm = jnp.transpose(xp, (1, 0, 2)).reshape(CIN, B_pad * Npi_pad)

    # ---- conv weights: [Cout, 9*Cin] im2col layout (tap-major, ci minor), bf16 --
    def conv_w(w, scale=1.0):
        co, ci = w.shape[0], w.shape[1]
        return (scale * jnp.transpose(w, (0, 2, 3, 1)).reshape(co, 9 * ci)
                ).astype(jnp.bfloat16)

    w0m, b0 = conv_w(params["w0"]), params["b0"].reshape(D, 1).astype(jnp.float32)
    w1m, b1 = conv_w(params["w1"]), params["b1"].reshape(D, 1).astype(jnp.float32)
    w2m, b2 = conv_w(params["w2"], 0.25), params["b2"].reshape(D, 1).astype(jnp.float32)
    w3m, b3 = conv_w(params["w3"]), params["b3"].reshape(D, 1).astype(jnp.float32)

    # ---- masks over the flat padded layout (tiled over the N images of a block) --
    def tile_flat(img2d, rows=1):
        flat = jnp.pad(img2d.reshape(rows, Npi), ((0, 0), (0, Npi_pad - Npi)))
        return jnp.tile(flat, (1, N))

    interior = jnp.zeros((H + 2, W + 2), jnp.float32).at[1:H + 1, 1:W + 1].set(1.0)
    spread = jnp.zeros((H + 2, W + 2), jnp.float32).at[1:H:2, 1:W:2].set(1.0)
    mask_full = tile_flat(interior)               # (1, L)
    mask_spread = tile_flat(spread)               # (1, L)

    # ---- linear heads: weights scattered to the "spread" half-res slots ---------
    def head_spread(wvec):
        w3d = wvec.reshape(D, Hh, Wh).astype(jnp.float32)
        buf = jnp.zeros((D, H + 2, W + 2), jnp.float32).at[:, 1:H:2, 1:W:2].set(w3d)
        return tile_flat(buf, rows=D)             # (D, L)

    wh1 = head_spread(params["f1_w"])
    wh2 = head_spread(params["f2_w"])
    whq = head_spread(params["fq_w"])
    bh1 = params["f1_b"].reshape(1, 1).astype(jnp.float32)
    bh2 = params["f2_b"].reshape(1, 1).astype(jnp.float32)
    bhq = params["fq_b"].reshape(1, 1).astype(jnp.float32)

    # Per-image lane-block selector: sel[p, b] = 1 iff lane p belongs to image b.
    sel = ((jnp.arange(L) // Npi_pad)[:, None] == jnp.arange(128)[None, :]
           ).astype(jnp.float32)                  # (L, 128)

    # Flat-lane offsets of the 3x3 taps (full-res) and their stride-2 versions.
    offs1 = tuple((dy - 1) * (W + 2) + (dx - 1)
                  for dy in range(3) for dx in range(3))
    offs2 = tuple(2 * o for o in offs1)

    kernel = functools.partial(_denoise_kernel, W, L, D, offs1, offs2, roll_jnp)
    const = lambda i: (0, 0)

    out = pl.pallas_call(
        kernel,
        grid=(num_blocks,),
        in_specs=[
            pl.BlockSpec((CIN, L), lambda i: (0, i)),       # x (channel-major flat)
            pl.BlockSpec((D, 9 * CIN), const), pl.BlockSpec((D, 1), const),
            pl.BlockSpec((D, 9 * D), const),   pl.BlockSpec((D, 1), const),
            pl.BlockSpec((D, 9 * D), const),   pl.BlockSpec((D, 1), const),
            pl.BlockSpec((D, 9 * D), const),   pl.BlockSpec((D, 1), const),
            pl.BlockSpec((1, L), const),                    # interior mask
            pl.BlockSpec((1, L), const),                    # spread (half-res) mask
            pl.BlockSpec((D, L), const),                    # f1 spread weight
            pl.BlockSpec((D, L), const),                    # f2 spread weight
            pl.BlockSpec((D, L), const),                    # fq spread weight
            pl.BlockSpec((L, 128), const),                  # per-image selector
            pl.BlockSpec((1, 1), const), pl.BlockSpec((1, 1), const),
            pl.BlockSpec((1, 1), const),
        ],
        out_specs=pl.BlockSpec((1, 128), lambda i: (i, 0)),
        out_shape=jax.ShapeDtypeStruct((num_blocks, 128), jnp.float32),
        compiler_params=pltpu.CompilerParams(
            dimension_semantics=("parallel",)),             # batch blocks independent
    )(x_cm, w0m, b0, w1m, b1, w2m, b2, w3m, b3,
      mask_full, mask_spread, wh1, wh2, whq, sel, bh1, bh2, bhq)

    return out[:, :N].reshape(-1)[:B]


def reference_forward(x_nchw, params):
    """Pure-JAX reference reproducing the PyTorch module (NCHW, f32 precision)."""
    elu = lambda v: jnp.where(v > 0, v, jnp.exp(v) - 1.0)

    def conv(x, w, b):
        y = jax.lax.conv_general_dilated(
            x, w, window_strides=(1, 1), padding="SAME",
            dimension_numbers=("NCHW", "OIHW", "NCHW"),
            precision=jax.lax.Precision.HIGHEST)
        return y + b.reshape(1, -1, 1, 1)

    B = x_nchw.shape[0]
    o = conv(x_nchw, params["w0"], params["b0"])
    o1 = conv(o, params["w1"], params["b1"])
    o2 = elu(o1) + o1
    _, C, H, W = o2.shape
    o3 = o2.reshape(B, C, H // 2, 2, W // 2, 2).mean(axis=(3, 5))
    o4 = conv(o3, params["w2"], params["b2"])
    o5 = elu(o4) + o4
    o7 = conv(o5, params["w3"], params["b3"])
    o8 = elu(o7)
    flat = o8.reshape(B, -1)
    l1 = flat @ params["f1_w"].T + params["f1_b"]
    l2 = flat @ params["f2_w"].T + params["f2_b"]
    lq = (flat ** 2) @ params["fq_w"].T + params["fq_b"]
    return (l1 * l2 + lq).reshape(-1)


if __name__ == "__main__":
    # Denoise_net(in_channels=CIN, dim=D, size=SIZE, number=D*SIZE//2) so that
    # Linear in_features (= (size//2)*number) equals dim*(size//2)^2 from flatten.
    B, CIN, D, SIZE = 2, 4, 8, 16
    F = D * (SIZE // 2) * (SIZE // 2)

    key = jax.random.PRNGKey(0)
    ks = jax.random.split(key, 16)
    params = {
        "w0": jax.random.normal(ks[0], (D, CIN, 3, 3), jnp.float32) * 0.1,
        "b0": jax.random.normal(ks[1], (D,), jnp.float32) * 0.1,
        "w1": jax.random.normal(ks[2], (D, D, 3, 3), jnp.float32) * 0.1,
        "b1": jax.random.normal(ks[3], (D,), jnp.float32) * 0.1,
        "w2": jax.random.normal(ks[4], (D, D, 3, 3), jnp.float32) * 0.1,
        "b2": jax.random.normal(ks[5], (D,), jnp.float32) * 0.1,
        "w3": jax.random.normal(ks[6], (D, D, 3, 3), jnp.float32) * 0.1,
        "b3": jax.random.normal(ks[7], (D,), jnp.float32) * 0.1,
        "f1_w": jax.random.normal(ks[8], (1, F), jnp.float32) * 0.1,
        "f1_b": jax.random.normal(ks[9], (1,), jnp.float32) * 0.1,
        "f2_w": jax.random.normal(ks[10], (1, F), jnp.float32) * 0.1,
        "f2_b": jax.random.normal(ks[11], (1,), jnp.float32) * 0.1,
        "fq_w": jax.random.normal(ks[12], (1, F), jnp.float32) * 0.1,
        "fq_b": jax.random.normal(ks[13], (1,), jnp.float32) * 0.1,
    }
    x = jax.random.normal(ks[14], (B, CIN, SIZE, SIZE), jnp.float32)

    out = denoise_net_forward(x, params)
    out = jax.block_until_ready(out)
    assert out.shape == (B,)

    ref = reference_forward(x, params)
    if not jnp.allclose(out, ref, rtol=5e-2, atol=5e-2):
        raise AssertionError(f"mismatch: pallas={out}, ref={ref}")

    print("KERNEL_OK")
</pallas_src>

<mosaic_0001>
module attributes {stable_mosaic.version = 11 : i64} {
  func.func @_roll_probe_kernel(%arg0: memref<8x128xf32, #tpu.memory_space<vmem>>, %arg1: memref<8x128xf32, #tpu.memory_space<vmem>>) attributes {dimension_semantics = [], scalar_prefetch = 0 : i64, scratch_operands = 0 : i64, tpu.core_type = #tpu.core_type<tc>} {
    %c0 = arith.constant 0 : index
    %c0_0 = arith.constant 0 : index
    %0 = vector.load %arg0[%c0, %c0_0] : memref<8x128xf32, #tpu.memory_space<vmem>>, vector<8x128xf32>
    %c1_i32 = arith.constant 1 : i32
    %1 = tpu.dynamic_rotate %0 by %c1_i32 dim 1 : vector<8x128xf32>, i32 -> vector<8x128xf32>
    %c0_1 = arith.constant 0 : index
    %c0_2 = arith.constant 0 : index
    %2 = vector.load %arg1[%c0_1, %c0_2] : memref<8x128xf32, #tpu.memory_space<vmem>>, vector<8x128xf32>
    tpu.vector_store %arg1[%c0_1, %c0_2], %1 {strides = array<i32>} : memref<8x128xf32, #tpu.memory_space<vmem>>, vector<8x128xf32>,
    return
  }
}

</mosaic_0001>

<llo_original>
// kernel: tpu_custom_call.1
$region0: #{tpu_custom_call.1}
  #allocation0 [shape = 'u32[]', space=smem, size = 0x4, offset = 0x4, fixed_abs, tag = 'smem constant byte address 0x4 - core index']
  #allocation1 [shape = 'u32[144,128]{1,0:T(1,128)}', space=vmem, size = 0x12000, scoped, tag = 'internal scratch']
  %s0 = inlined_call_operand.hbm [shape: f32[8,128], index: 0, kind: input, shape index: {}]
  %s1 = inlined_call_operand.hbm [shape: f32[8,128], index: 1, kind: output, shape index: {}]
  %s2 = sld [smem:[#allocation0]]
  $region18: #{tpu_custom_call.1} parent=0
    _
  %s4 = ssub.s32 1, %s2
  %s5 = scalar_select 0, %s4, %s2
  $region1: #{tpu_custom_call.1} parent=0
    #allocation2 [shape = 'u8[4096]{0}', space=vmem, size = 0x1000, scoped, tag = 'input window, operand 0, single buffered']
    #allocation3 [shape = 's32[1]{0}', space=sflag, size = 0x4, scoped, tag = 'scoped memory for tpu_custom_call.1']
    #allocation4 [shape = 's32[1]{0}', space=sflag, size = 0x4, scoped, tag = 'scoped memory for tpu_custom_call.1']
    #allocation5 [shape = 'u8[4096]{0}', space=vmem, size = 0x1000, scoped, tag = 'output window, operand 0, single buffered']
    %6 = vsyncpa [#allocation3], 0
    %7 = vsyncpa [#allocation4], 0
    // Predicated region
    $region2: #{tpu_custom_call.1} parent=1 // pred_check
      _
    $region3: #{tpu_custom_call.1} parent=1 // pred_check_branch
      %9 = sbr.rel (0) target = $region5
    $region4: #{tpu_custom_call.1} parent=1 // pred_region
      %s11 = ssub.s32 128, 128
      %12 = vsyncadd [#allocation3], %s11
      %s14 = sshll.u32 [#allocation2], 4
      %s15 = int_to_ptr.vmem [resolvable:$true] %s14
      %17 = dma.hbm_to_vmem [thread:$0]  %s0, 128, %s15, [#allocation3]
    $region5: #{tpu_custom_call.1} parent=1 // pred_fallthru
      _
    // Predicated region
    $region6: #{tpu_custom_call.1} parent=1 // pred_check
      _
    $region7: #{tpu_custom_call.1} parent=1 // pred_check_branch
      %19 = sbr.rel (0) target = $region9
    $region8: #{tpu_custom_call.1} parent=1 // pred_region
      %20 = dma.done [#allocation3], 128
    $region9: #{tpu_custom_call.1} parent=1 // pred_fallthru
      _
    %v21 = vld [vmem:[#allocation2] sm:$0xff]
    %22 = vrot.lane.b32.xlu0 %v21, 1
    %v23 = vpop.permute.xlu0 %22
    %24 = vst [vmem:[#allocation5] sm:$0xff] %v23
    // Predicated region
    $region10: #{tpu_custom_call.1} parent=1 // pred_check
      _
    $region11: #{tpu_custom_call.1} parent=1 // pred_check_branch
      %26 = sbr.rel (0) target = $region13
    $region12: #{tpu_custom_call.1} parent=1 // pred_region
      %s28 = ssub.s32 128, 128
      %29 = vsyncadd [#allocation4], %s28
      %s31 = sshll.u32 [#allocation5], 4
      %s32 = int_to_ptr.vmem [resolvable:$true] %s31
      %34 = dma.vmem_to_hbm [thread:$0]  %s32, 128, %s1, [#allocation4]
    $region13: #{tpu_custom_call.1} parent=1 // pred_fallthru
      _
    // Predicated region
    $region14: #{tpu_custom_call.1} parent=1 // pred_check
      _
    $region15: #{tpu_custom_call.1} parent=1 // pred_check_branch
      %36 = sbr.rel (0) target = $region17
    $region16: #{tpu_custom_call.1} parent=1 // pred_region
      %37 = dma.done [#allocation4], 128
    $region17: #{tpu_custom_call.1} parent=1 // pred_fallthru
      _
    %38 = vsyncpa [#allocation3], 1
    %39 = vsyncpa [#allocation4], 1

</llo_original>
